<compile_context>
chip_gen: v5e
topology: v5e:2x2
jax: 0.10.0
libtpu: 0.0.40
codegen_flags: <defaults>
</compile_context>

<pallas_src>
import functools

import jax
import jax.numpy as jnp
from jax.experimental import pallas as pl
from jax.experimental.pallas import tpu as pltpu

# ------------------------------- small config --------------------------------
N = 2    # batch
D = 8    # depth channels == the `C` constructor arg
H = 16   # EEG electrodes (pooled away by AdaptiveAvgPool2d((1, W)))
W = 32   # time samples   == the `W` constructor arg
K = 7    # learnable kernel size along depth (odd -> "same" output size)


# ------------------------------- Pallas kernel --------------------------------
def _eeg_depth_attention_kernel(x_ref, band_ref, o_ref, *, n, h, w, scale):
    """x_ref/o_ref: (N, D, H*W) VMEM; band_ref: (D, D) VMEM (Toeplitz band, 1/H folded in)."""
    x = x_ref[...]                                            # (N, D, H*W) f32
    band = band_ref[...]                                      # (D, D)

    # AdaptiveAvgPool2d((1, W)) == mean over electrodes H. The 1/H factor already
    # lives inside `band`, so here it is a plain sum of the H lane-chunks of width W.
    pooled = x[:, :, :w]
    for hh in range(1, h):                                    # static, tiny VALU chain
        pooled = pooled + x[:, :, hh * w:(hh + 1) * w]        # (N, D, W)

    # Fold the batch onto the lane axis so conv + softmax run exactly once.
    pooled_dn = jnp.concatenate([pooled[i] for i in range(n)], axis=-1)   # (D, N*W)

    # Depth-wise (k,1) "same" conv == a single MXU matmul with the banded matrix.
    # The conv bias is dropped: it is constant along the softmax (depth) axis.
    y = jnp.dot(band, pooled_dn, preferred_element_type=jnp.float32)      # (D, N*W)

    # Softmax over depth (axis 0); the `* C` output scale is folded into the
    # EUP reciprocal so no separate (D, H*W) scale multiply is needed.
    m = jnp.max(y, axis=0, keepdims=True)                     # (1, N*W)
    e = jnp.exp(y - m)                                        # EUP
    s = jnp.sum(e, axis=0, keepdims=True)                     # (1, N*W)
    att = e * (pl.reciprocal(s, approx=True) * scale)         # (D, N*W), includes *C

    # out[n, d, h*W + w] = att[d, n*W + w] * x[n, d, h*W + w]
    # Repeat att along the flattened H axis (lane concat) -> lane-dense 512-wide store.
    att_full = jnp.stack(
        [jnp.concatenate([att[:, i * w:(i + 1) * w]] * h, axis=-1) for i in range(n)],
        axis=0)                                               # (N, D, H*W)
    o_ref[...] = att_full * x                                 # single lane-dense store


# ------------------------------ wrapper / glue --------------------------------
def _conv_band_matrix(conv_w, depth, k):
    """(D, D) band matrix B s.t. B @ v == Conv2d(1,1,(k,1),pad=(k//2,0)) along depth."""
    d_out = jnp.arange(depth)[:, None]
    d_in = jnp.arange(depth)[None, :]
    tap = d_in - d_out + (k // 2)                             # PyTorch conv == cross-correlation
    valid = (tap >= 0) & (tap < k)
    return jnp.where(valid, conv_w[jnp.clip(tap, 0, k - 1)], 0.0).astype(jnp.float32)


@functools.partial(jax.jit, static_argnames=("k",))
def eeg_depth_attention(x, conv_w, conv_b, *, k=K):
    """x: (N, D, H, W) f32, conv_w: (k,) f32, conv_b: () f32 -> (N, D, H, W) f32."""
    n, d, h, w = x.shape
    assert k % 2 == 1, "odd kernel size required for 'same'-size depth conv"
    del conv_b  # constant along the softmax axis -> cancels exactly; dead work removed

    # Fold the AdaptiveAvgPool 1/H factor into the conv band at trace time.
    band = _conv_band_matrix(conv_w, d, k) * (1.0 / h)        # (D, D)

    # Free, contiguous reshape: lane-dense (H*W = 512) layout for the kernel.
    x_flat = x.reshape(n, d, h * w).astype(jnp.float32)

    kern = functools.partial(_eeg_depth_attention_kernel,
                             n=n, h=h, w=w, scale=float(d))
    out = pl.pallas_call(
        kern,
        out_shape=jax.ShapeDtypeStruct((n, d, h * w), jnp.float32),
        in_specs=[
            pl.BlockSpec(memory_space=pltpu.MemorySpace.VMEM),   # x  (full block)
            pl.BlockSpec(memory_space=pltpu.MemorySpace.VMEM),   # band (full block)
        ],
        out_specs=pl.BlockSpec(memory_space=pltpu.MemorySpace.VMEM),
    )(x_flat, band)
    return out.reshape(n, d, h, w)


# ------------------------- pure-JAX reference (check) -------------------------
def _reference(x, conv_w, conv_b, k):
    n, d, h, w = x.shape
    pooled = jnp.mean(x, axis=2, keepdims=True)               # (N, D, 1, W)
    xt = jnp.transpose(pooled, (0, 2, 1, 3))                  # (N, 1, D, W)
    pad = k // 2
    xp = jnp.pad(xt, ((0, 0), (0, 0), (pad, pad), (0, 0)))
    y = sum(conv_w[j] * xp[:, :, j:j + d, :] for j in range(k)) + conv_b
    y = jax.nn.softmax(y, axis=-2)                            # softmax over depth
    y = jnp.transpose(y, (0, 2, 1, 3))                        # (N, D, 1, W)
    return y * d * x


# ------------------------------------ main -------------------------------------
if __name__ == "__main__":
    key = jax.random.PRNGKey(0)
    kx, kw, kb = jax.random.split(key, 3)

    x = jax.random.normal(kx, (N, D, H, W), jnp.float32)
    bound = 1.0 / (K ** 0.5)
    conv_w = jax.random.uniform(kw, (K,), jnp.float32, -bound, bound)
    conv_b = jax.random.uniform(kb, (), jnp.float32, -bound, bound)

    out = eeg_depth_attention(x, conv_w, conv_b, k=K)
    out = jax.block_until_ready(out)

    assert out.shape == (N, D, H, W)
    assert bool(jnp.all(jnp.isfinite(out)))
    ref = _reference(x, conv_w, conv_b, K)
    assert bool(jnp.allclose(out, ref, rtol=2e-2, atol=1e-4)), "mismatch vs JAX reference"

    print("KERNEL_OK")
</pallas_src>

<mosaic_0001>
module attributes {stable_mosaic.version = 11 : i64} {
  func.func @_eeg_depth_attention_kernel(%arg0: memref<2x8x512xf32, #tpu.memory_space<vmem>>, %arg1: memref<8x8xf32, #tpu.memory_space<vmem>>, %arg2: memref<2x8x512xf32, #tpu.memory_space<vmem>>) attributes {dimension_semantics = [], scalar_prefetch = 0 : i64, scratch_operands = 0 : i64, tpu.core_type = #tpu.core_type<tc>} {
    %c0 = arith.constant 0 : index
    %c0_0 = arith.constant 0 : index
    %c0_1 = arith.constant 0 : index
    %0 = vector.load %arg0[%c0, %c0_0, %c0_1] : memref<2x8x512xf32, #tpu.memory_space<vmem>>, vector<2x8x512xf32>
    %c0_2 = arith.constant 0 : index
    %c0_3 = arith.constant 0 : index
    %1 = vector.load %arg1[%c0_2, %c0_3] : memref<8x8xf32, #tpu.memory_space<vmem>>, vector<8x8xf32>
    %2 = vector.extract_strided_slice %0 {offsets = [0, 0, 0], sizes = [2, 8, 32], strides = [1, 1, 1]} : vector<2x8x512xf32> to vector<2x8x32xf32>
    %3 = vector.extract_strided_slice %0 {offsets = [0, 0, 32], sizes = [2, 8, 32], strides = [1, 1, 1]} : vector<2x8x512xf32> to vector<2x8x32xf32>
    %4 = arith.addf %2, %3 : vector<2x8x32xf32>
    %5 = vector.extract_strided_slice %0 {offsets = [0, 0, 64], sizes = [2, 8, 32], strides = [1, 1, 1]} : vector<2x8x512xf32> to vector<2x8x32xf32>
    %6 = arith.addf %4, %5 : vector<2x8x32xf32>
    %7 = vector.extract_strided_slice %0 {offsets = [0, 0, 96], sizes = [2, 8, 32], strides = [1, 1, 1]} : vector<2x8x512xf32> to vector<2x8x32xf32>
    %8 = arith.addf %6, %7 : vector<2x8x32xf32>
    %9 = vector.extract_strided_slice %0 {offsets = [0, 0, 128], sizes = [2, 8, 32], strides = [1, 1, 1]} : vector<2x8x512xf32> to vector<2x8x32xf32>
    %10 = arith.addf %8, %9 : vector<2x8x32xf32>
    %11 = vector.extract_strided_slice %0 {offsets = [0, 0, 160], sizes = [2, 8, 32], strides = [1, 1, 1]} : vector<2x8x512xf32> to vector<2x8x32xf32>
    %12 = arith.addf %10, %11 : vector<2x8x32xf32>
    %13 = vector.extract_strided_slice %0 {offsets = [0, 0, 192], sizes = [2, 8, 32], strides = [1, 1, 1]} : vector<2x8x512xf32> to vector<2x8x32xf32>
    %14 = arith.addf %12, %13 : vector<2x8x32xf32>
    %15 = vector.extract_strided_slice %0 {offsets = [0, 0, 224], sizes = [2, 8, 32], strides = [1, 1, 1]} : vector<2x8x512xf32> to vector<2x8x32xf32>
    %16 = arith.addf %14, %15 : vector<2x8x32xf32>
    %17 = vector.extract_strided_slice %0 {offsets = [0, 0, 256], sizes = [2, 8, 32], strides = [1, 1, 1]} : vector<2x8x512xf32> to vector<2x8x32xf32>
    %18 = arith.addf %16, %17 : vector<2x8x32xf32>
    %19 = vector.extract_strided_slice %0 {offsets = [0, 0, 288], sizes = [2, 8, 32], strides = [1, 1, 1]} : vector<2x8x512xf32> to vector<2x8x32xf32>
    %20 = arith.addf %18, %19 : vector<2x8x32xf32>
    %21 = vector.extract_strided_slice %0 {offsets = [0, 0, 320], sizes = [2, 8, 32], strides = [1, 1, 1]} : vector<2x8x512xf32> to vector<2x8x32xf32>
    %22 = arith.addf %20, %21 : vector<2x8x32xf32>
    %23 = vector.extract_strided_slice %0 {offsets = [0, 0, 352], sizes = [2, 8, 32], strides = [1, 1, 1]} : vector<2x8x512xf32> to vector<2x8x32xf32>
    %24 = arith.addf %22, %23 : vector<2x8x32xf32>
    %25 = vector.extract_strided_slice %0 {offsets = [0, 0, 384], sizes = [2, 8, 32], strides = [1, 1, 1]} : vector<2x8x512xf32> to vector<2x8x32xf32>
    %26 = arith.addf %24, %25 : vector<2x8x32xf32>
    %27 = vector.extract_strided_slice %0 {offsets = [0, 0, 416], sizes = [2, 8, 32], strides = [1, 1, 1]} : vector<2x8x512xf32> to vector<2x8x32xf32>
    %28 = arith.addf %26, %27 : vector<2x8x32xf32>
    %29 = vector.extract_strided_slice %0 {offsets = [0, 0, 448], sizes = [2, 8, 32], strides = [1, 1, 1]} : vector<2x8x512xf32> to vector<2x8x32xf32>
    %30 = arith.addf %28, %29 : vector<2x8x32xf32>
    %31 = vector.extract_strided_slice %0 {offsets = [0, 0, 480], sizes = [2, 8, 32], strides = [1, 1, 1]} : vector<2x8x512xf32> to vector<2x8x32xf32>
    %32 = arith.addf %30, %31 : vector<2x8x32xf32>
    %33 = vector.extract_strided_slice %32 {offsets = [0, 0, 0], sizes = [1, 8, 32], strides = [1, 1, 1]} : vector<2x8x32xf32> to vector<1x8x32xf32>
    %34 = vector.shape_cast %33 : vector<1x8x32xf32> to vector<8x32xf32>
    %35 = vector.extract_strided_slice %32 {offsets = [1, 0, 0], sizes = [1, 8, 32], strides = [1, 1, 1]} : vector<2x8x32xf32> to vector<1x8x32xf32>
    %36 = vector.shape_cast %35 : vector<1x8x32xf32> to vector<8x32xf32>
    %37 = tpu.concatenate %34, %36 in 1 : vector<8x32xf32>, vector<8x32xf32> -> vector<8x64xf32>
    %cst = arith.constant dense<0.000000e+00> : vector<8x64xf32>
    %38 = tpu.matmul %1, %37, %cst {dimension_numbers = #tpu.dot_dimension_numbers<[1], [0], [0], [1], [0, 0, 1, 1], [], []>} : vector<8x8xf32>, vector<8x64xf32>, vector<8x64xf32> -> vector<8x64xf32>
    %cst_4 = arith.constant dense<0xFF800000> : vector<64xf32>
    %39 = vector.multi_reduction <maximumf>, %38, %cst_4 [0] : vector<8x64xf32> to vector<64xf32>
    %40 = vector.shape_cast %39 : vector<64xf32> to vector<1x64xf32>
    %41 = vector.broadcast %40 : vector<1x64xf32> to vector<8x64xf32>
    %42 = arith.subf %38, %41 : vector<8x64xf32>
    %43 = math.exp %42 : vector<8x64xf32>
    %cst_5 = arith.constant dense<0.000000e+00> : vector<64xf32>
    %44 = vector.multi_reduction <add>, %43, %cst_5 [0] : vector<8x64xf32> to vector<64xf32>
    %45 = vector.shape_cast %44 : vector<64xf32> to vector<1x64xf32>
    %46 = tpu.reciprocal %45 {approx = true} : vector<1x64xf32> -> vector<1x64xf32>
    %cst_6 = arith.constant 8.000000e+00 : f32
    %47 = vector.broadcast %cst_6 : f32 to vector<1x64xf32>
    %48 = arith.mulf %46, %47 : vector<1x64xf32>
    %49 = vector.broadcast %48 : vector<1x64xf32> to vector<8x64xf32>
    %50 = arith.mulf %43, %49 : vector<8x64xf32>
    %51 = vector.extract_strided_slice %50 {offsets = [0, 0], sizes = [8, 32], strides = [1, 1]} : vector<8x64xf32> to vector<8x32xf32>
    %52 = tpu.concatenate %51, %51, %51, %51, %51, %51, %51, %51, %51, %51, %51, %51, %51, %51, %51, %51 in 1 : vector<8x32xf32>, vector<8x32xf32>, vector<8x32xf32>, vector<8x32xf32>, vector<8x32xf32>, vector<8x32xf32>, vector<8x32xf32>, vector<8x32xf32>, vector<8x32xf32>, vector<8x32xf32>, vector<8x32xf32>, vector<8x32xf32>, vector<8x32xf32>, vector<8x32xf32>, vector<8x32xf32>, vector<8x32xf32> -> vector<8x512xf32>
    %53 = vector.extract_strided_slice %50 {offsets = [0, 32], sizes = [8, 32], strides = [1, 1]} : vector<8x64xf32> to vector<8x32xf32>
    %54 = tpu.concatenate %53, %53, %53, %53, %53, %53, %53, %53, %53, %53, %53, %53, %53, %53, %53, %53 in 1 : vector<8x32xf32>, vector<8x32xf32>, vector<8x32xf32>, vector<8x32xf32>, vector<8x32xf32>, vector<8x32xf32>, vector<8x32xf32>, vector<8x32xf32>, vector<8x32xf32>, vector<8x32xf32>, vector<8x32xf32>, vector<8x32xf32>, vector<8x32xf32>, vector<8x32xf32>, vector<8x32xf32>, vector<8x32xf32> -> vector<8x512xf32>
    %55 = vector.shape_cast %52 : vector<8x512xf32> to vector<1x8x512xf32>
    %56 = vector.shape_cast %54 : vector<8x512xf32> to vector<1x8x512xf32>
    %57 = tpu.concatenate %55, %56 in 0 : vector<1x8x512xf32>, vector<1x8x512xf32> -> vector<2x8x512xf32>
    %58 = arith.mulf %57, %0 : vector<2x8x512xf32>
    %c0_7 = arith.constant 0 : index
    %c0_8 = arith.constant 0 : index
    %c0_9 = arith.constant 0 : index
    %59 = vector.load %arg2[%c0_7, %c0_8, %c0_9] : memref<2x8x512xf32, #tpu.memory_space<vmem>>, vector<2x8x512xf32>
    tpu.vector_store %arg2[%c0_7, %c0_8, %c0_9], %58 {strides = array<i32>} : memref<2x8x512xf32, #tpu.memory_space<vmem>>, vector<2x8x512xf32>,
    return
  }
}

</mosaic_0001>

<llo_original>
// kernel: eeg_depth_attention.1
$region0: #{eeg_depth_attention.1}
  #allocation0 [shape = 'u32[]', space=smem, size = 0x4, offset = 0x4, fixed_abs, tag = 'smem constant byte address 0x4 - core index']
  #allocation1 [shape = 'u32[72,128]{1,0:T(1,128)}', space=vmem, size = 0x9000, scoped, tag = 'internal scratch']
  %s0 = inlined_call_operand.vmem [shape: f32[2,8,512], index: 0, kind: input, shape index: {}]
  %s1 = inlined_call_operand.vmem [shape: f32[8,8], index: 1, kind: input, shape index: {}]
  %s2 = inlined_call_operand.vmem [shape: f32[2,8,512], index: 2, kind: output, shape index: {}]
  %s3 = sld [smem:[#allocation0]]
  $region18: #{eeg_depth_attention.1} parent=0
    _
  %s5 = ssub.s32 1, %s3
  %s6 = scalar_select 0, %s5, %s3
  // Predicated region
  $region2: #{eeg_depth_attention.1} parent=0 // pred_check
    _
  $region3: #{eeg_depth_attention.1} parent=0 // pred_check_branch
    %8 = sbr.rel (0) target = $region5
  $region4: #{eeg_depth_attention.1} parent=0 // pred_region
    _
  $region5: #{eeg_depth_attention.1} parent=0 // pred_fallthru
    _
  // Predicated region
  $region6: #{eeg_depth_attention.1} parent=0 // pred_check
    _
  $region7: #{eeg_depth_attention.1} parent=0 // pred_check_branch
    %10 = sbr.rel (0) target = $region9
  $region8: #{eeg_depth_attention.1} parent=0 // pred_region
    _
  $region9: #{eeg_depth_attention.1} parent=0 // pred_fallthru
    _
  %v11 = vld [vmem:[%s0] sm:$0xff]
  %v12 = vld [vmem:[%s0 + $0x8] sm:$0xff]
  %v13 = vld [vmem:[%s0 + $0x10] sm:$0xff]
  %v14 = vld [vmem:[%s0 + $0x18] sm:$0xff]
  %v15 = vld [vmem:[%s0 + $0x20] sm:$0xff]
  %v16 = vld [vmem:[%s0 + $0x28] sm:$0xff]
  %v17 = vld [vmem:[%s0 + $0x30] sm:$0xff]
  %v18 = vld [vmem:[%s0 + $0x38] sm:$0xff]
  %v19 = vld [vmem:[%s1] sm:$0xff]
  %22 = vrot.lane.b32.xlu0 %v11, 96
  %v23 = vpop.permute.xlu0 %22
  %24 = vrot.lane.b32.xlu0 %v15, 96
  %v25 = vpop.permute.xlu0 %24
  %v28 = vadd.f32 %v11, %v23
  %v29 = vadd.f32 %v15, %v25
  %30 = vrot.lane.b32.xlu0 %v11, 64
  %v31 = vpop.permute.xlu0 %30
  %32 = vrot.lane.b32.xlu0 %v15, 64
  %v33 = vpop.permute.xlu0 %32
  %v36 = vadd.f32 %v28, %v31
  %v37 = vadd.f32 %v29, %v33
  %38 = vrot.lane.b32.xlu0 %v11, 32
  %v39 = vpop.permute.xlu0 %38
  %40 = vrot.lane.b32.xlu0 %v15, 32
  %v41 = vpop.permute.xlu0 %40
  %v44 = vadd.f32 %v36, %v39
  %v45 = vadd.f32 %v37, %v41
  %v46 = vadd.f32 %v44, %v12
  %v47 = vadd.f32 %v45, %v16
  %50 = vrot.lane.b32.xlu0 %v12, 96
  %v51 = vpop.permute.xlu0 %50
  %52 = vrot.lane.b32.xlu0 %v16, 96
  %v53 = vpop.permute.xlu0 %52
  %v56 = vadd.f32 %v46, %v51
  %v57 = vadd.f32 %v47, %v53
  %58 = vrot.lane.b32.xlu0 %v12, 64
  %v59 = vpop.permute.xlu0 %58
  %60 = vrot.lane.b32.xlu0 %v16, 64
  %v61 = vpop.permute.xlu0 %60
  %v64 = vadd.f32 %v56, %v59
  %v65 = vadd.f32 %v57, %v61
  %66 = vrot.lane.b32.xlu0 %v12, 32
  %v67 = vpop.permute.xlu0 %66
  %68 = vrot.lane.b32.xlu0 %v16, 32
  %v69 = vpop.permute.xlu0 %68
  %v72 = vadd.f32 %v64, %v67
  %v73 = vadd.f32 %v65, %v69
  %v74 = vadd.f32 %v72, %v13
  %v75 = vadd.f32 %v73, %v17
  %78 = vrot.lane.b32.xlu0 %v13, 96
  %v79 = vpop.permute.xlu0 %78
  %80 = vrot.lane.b32.xlu0 %v17, 96
  %v81 = vpop.permute.xlu0 %80
  %v84 = vadd.f32 %v74, %v79
  %v85 = vadd.f32 %v75, %v81
  %86 = vrot.lane.b32.xlu0 %v13, 64
  %v87 = vpop.permute.xlu0 %86
  %88 = vrot.lane.b32.xlu0 %v17, 64
  %v89 = vpop.permute.xlu0 %88
  %v92 = vadd.f32 %v84, %v87
  %v93 = vadd.f32 %v85, %v89
  %94 = vrot.lane.b32.xlu0 %v13, 32
  %v95 = vpop.permute.xlu0 %94
  %96 = vrot.lane.b32.xlu0 %v17, 32
  %v97 = vpop.permute.xlu0 %96
  %v100 = vadd.f32 %v92, %v95
  %v101 = vadd.f32 %v93, %v97
  %v102 = vadd.f32 %v100, %v14
  %v103 = vadd.f32 %v101, %v18
  %106 = vrot.lane.b32.xlu0 %v14, 96
  %v107 = vpop.permute.xlu0 %106
  %108 = vrot.lane.b32.xlu0 %v18, 96
  %v109 = vpop.permute.xlu0 %108
  %v112 = vadd.f32 %v102, %v107
  %v113 = vadd.f32 %v103, %v109
  %114 = vrot.lane.b32.xlu0 %v14, 64
  %v115 = vpop.permute.xlu0 %114
  %116 = vrot.lane.b32.xlu0 %v18, 64
  %v117 = vpop.permute.xlu0 %116
  %v120 = vadd.f32 %v112, %v115
  %v121 = vadd.f32 %v113, %v117
  %122 = vrot.lane.b32.xlu0 %v14, 32
  %v123 = vpop.permute.xlu0 %122
  %124 = vrot.lane.b32.xlu0 %v18, 32
  %v125 = vpop.permute.xlu0 %124
  %v128 = vadd.f32 %v120, %v123
  %v129 = vadd.f32 %v121, %v125
  %131 = vrot.lane.b32.xlu0 %v129, 32
  %v132 = vpop.permute.xlu0 %131
  %vm134 = vcmask 261120
  %v135 = vsel %vm134, %v128, %v132
  %vm136 = vcmask 64512
  %v138 = vsel %vm136, %v19, 0
  %140 = vmatpush.msra.mxu0 0.0
  %141 = vmatpush.msra.mxu0 0.0
  %142 = vmatpush.msra.mxu0 0.0
  %143 = vmatpush.msra.mxu0 0.0
  %144 = vmatpush.msra.mxu0 0.0
  %145 = vmatpush.msra.mxu0 0.0
  %146 = vmatpush.msra.mxu0 0.0
  %147 = vmatpush.msra.mxu0 0.0
  %148 = vmatpush.msra.mxu0 0.0
  %149 = vmatpush.msra.mxu0 0.0
  %150 = vmatpush.msra.mxu0 0.0
  %151 = vmatpush.msra.mxu0 0.0
  %152 = vmatpush.msra.mxu0 0.0
  %153 = vmatpush.msra.mxu0 0.0
  %154 = vmatpush.msra.mxu0 0.0
  %155 = vmatpush.msra.mxu0 %v135
  %156 = vmatmul.f32.gmra.mxu0 %v138
  %v157 = vpop.f32.mrf.mxu0
  %v158 = vadd.f32 0.0, %v157
  %159 = vdwg.mxu0
  %vm160 = vcmask 523264
  %v161 = vsel %vm160, %v158, -inf
  %v162 = vrot.slane %v161, 4
  %v163 = vmax.f32 %v161, %v162
  %v164 = vrot.slane %v163, 2
  %v165 = vmax.f32 %v163, %v164
  %v166 = vrot.slane %v165, 1
  %v167 = vmax.f32 %v165, %v166
  %v168 = vsub.f32 %v158, %v167
  %v169 = vmul.f32 %v168, 1.442695
  %v170 = vpow.pop %v169
  %v171 = vsel %vm160, %v170, 0.0
  %v172 = vrot.slane %v171, 4
  %v173 = vadd.f32 %v171, %v172
  %v174 = vrot.slane %v173, 2
  %v175 = vadd.f32 %v173, %v174
  %v176 = vrot.slane %v175, 1
  %v177 = vadd.f32 %v175, %v176
  %v178 = vrcp.pop %v177
  %v179 = vmul.f32 %v178, 8.0
  %v180 = vmul.f32 %v170, %v179
  %182 = vrot.lane.b32.xlu0 %v180, 32
  %v183 = vpop.permute.xlu0 %182
  %185 = vrot.lane.b32.xlu0 %v180, 64
  %v186 = vpop.permute.xlu0 %185
  %188 = vrot.lane.b32.xlu0 %v180, 96
  %v189 = vpop.permute.xlu0 %188
  %v191 = vsel %vm134, %v180, %v183
  %v192 = vsel %vm160, %v191, %v186
  %vm193 = vcmask 785408
  %v194 = vsel %vm193, %v192, %v189
  %v195 = vsel %vm134, %v189, %v180
  %v196 = vsel %vm160, %v195, %v183
  %v197 = vsel %vm193, %v196, %v186
  %v198 = vmul.f32 %v194, %v11
  %v199 = vmul.f32 %v194, %v12
  %v200 = vmul.f32 %v194, %v13
  %v201 = vmul.f32 %v194, %v14
  %v202 = vmul.f32 %v197, %v15
  %v203 = vmul.f32 %v197, %v16
  %v204 = vmul.f32 %v197, %v17
  %v205 = vmul.f32 %v197, %v18
  %206 = vst [vmem:[%s2] sm:$0xff] %v198
  %207 = vst [vmem:[%s2 + $0x8] sm:$0xff] %v199
  %208 = vst [vmem:[%s2 + $0x10] sm:$0xff] %v200
  %209 = vst [vmem:[%s2 + $0x18] sm:$0xff] %v201
  %210 = vst [vmem:[%s2 + $0x20] sm:$0xff] %v202
  %211 = vst [vmem:[%s2 + $0x28] sm:$0xff] %v203
  %212 = vst [vmem:[%s2 + $0x30] sm:$0xff] %v204
  %213 = vst [vmem:[%s2 + $0x38] sm:$0xff] %v205
  // Predicated region
  $region10: #{eeg_depth_attention.1} parent=0 // pred_check
    _
  $region11: #{eeg_depth_attention.1} parent=0 // pred_check_branch
    %215 = sbr.rel (0) target = $region13
  $region12: #{eeg_depth_attention.1} parent=0 // pred_region
    _
  $region13: #{eeg_depth_attention.1} parent=0 // pred_fallthru
    _
  // Predicated region
  $region14: #{eeg_depth_attention.1} parent=0 // pred_check
    _
  $region15: #{eeg_depth_attention.1} parent=0 // pred_check_branch
    %217 = sbr.rel (0) target = $region17
  $region16: #{eeg_depth_attention.1} parent=0 // pred_region
    _
  $region17: #{eeg_depth_attention.1} parent=0 // pred_fallthru
    _

</llo_original>
